<compile_context>
chip_gen: v7x
topology: tpu7x:2x2x1
jax: 0.10.0
libtpu: 0.0.40
codegen_flags: <defaults>
</compile_context>

<pallas_src>
import functools

import jax
import jax.numpy as jnp
from jax.experimental import pallas as pl
from jax.experimental.pallas import tpu as pltpu

_MiB = 1024 * 1024
# Finite "minus infinity": keeps 0 * (m_old - m_new) == 0 on the first class
# tile (a true -inf would give 0 * -inf = NaN in the online-softmax update).
_NEG_INIT = -1.7e38


def _round_up(v, m):
    return ((v + m - 1) // m) * m


def _vmem_capacity_bytes():
    try:
        info = pltpu.get_tpu_info()
        cap = getattr(info, "vmem_capacity_bytes", None)
        if cap:
            return int(cap)
    except Exception:
        pass
    return 128 * _MiB  # v5e / v6e default assumption


def _plan_tiles(B, C):
    """Generation-aware (tb, tc, vmem_limit_cap); blocks budgeted at f32 width."""
    vmem_cap = _vmem_capacity_bytes()
    if vmem_cap <= 96 * _MiB:                       # v7x-class (64 MiB per TC)
        limit_cap = min(48 * _MiB, (vmem_cap * 3) // 4)
    else:                                           # v5e / v6e (128 MiB)
        limit_cap = 96 * _MiB
    # One (tb, tc) block budget in f32-equivalent bytes; leaves room for the
    # double-buffered native input + f32 intermediates inside limit_cap.
    block_budget = max(_MiB, (limit_cap - 8 * _MiB) // 6)

    b_pad = _round_up(B, 8)
    rows_target = 512                               # ~85% of HBM roofline

    if C * 4 * rows_target <= block_budget:
        tc = C                                      # single class tile per step
        tb = block_budget // (C * 4)
    else:
        # Large vocab: tile C (online softmax) so VMEM use is independent of C.
        tb = min(rows_target, b_pad)
        tc = max(128, (block_budget // (tb * 4)) // 128 * 128)
        tc = min(tc, C)
        if tc < C and C % tc != 0:
            # Prefer a class tile that divides C (skips the tail-column mask)
            # if one exists within ~25% of the budgeted size.
            for cand in range(tc, max(128, (tc * 3) // 4) - 1, -128):
                if C % cand == 0:
                    tc = cand
                    break

    tb = max(8, (tb // 8) * 8)
    tb = min(tb, b_pad)
    # Keep >= 2 (ideally 4) batch tiles for megacore sharding on v7x and to
    # give the double-buffered input pipeline something to overlap.
    if B >= 1024:
        tb = min(tb, _round_up(pl.cdiv(B, 4), 8))
    elif B >= 512:
        tb = min(tb, _round_up(pl.cdiv(B, 2), 8))
    return tb, tc, limit_cap


def _cond_entropy_kernel(x_ref, out_ref, m_ref, s_ref, ez_ref, *,
                         tb, tc, total_batch, total_c,
                         needs_row_mask, needs_col_mask):
    i = pl.program_id(0)                  # batch tile  ("parallel")
    k = pl.program_id(1)                  # class tile  ("arbitrary", reduction)
    nk = pl.num_programs(1)

    @pl.when(k == 0)
    def _():
        m_ref[...] = jnp.full_like(m_ref, _NEG_INIT)
        s_ref[...] = jnp.zeros_like(s_ref)
        ez_ref[...] = jnp.zeros_like(ez_ref)

    x = x_ref[...]                                             # (tb, tc) native dtype
    m_old = m_ref[...]                                         # (tb, 1) f32

    if needs_col_mask:
        # Last class tile may read garbage columns; mask them with a large
        # finite negative so exp underflows to exactly 0 and e*z stays 0.
        col_ids = k * tc + jax.lax.broadcasted_iota(jnp.int32, (tb, tc), 1)
        xf = jnp.where(col_ids < total_c, x.astype(jnp.float32), _NEG_INIT)
        m_new = jnp.maximum(m_old, jnp.max(xf, axis=1, keepdims=True))
        z = xf - m_new
    else:
        # Row max in the native dtype (a selection, exact); the f32 cast is
        # fused into the subtract so no standalone f32 tile copy is forced.
        m_blk = jnp.max(x, axis=1, keepdims=True).astype(jnp.float32)
        m_new = jnp.maximum(m_old, m_blk)
        z = x.astype(jnp.float32) - m_new

    e = jnp.exp(z)                                             # (tb, tc) f32
    s_blk = jnp.sum(e, axis=1, keepdims=True)                  # (tb, 1)
    ez_blk = jnp.sum(e * z, axis=1, keepdims=True)             # (tb, 1)

    alpha = jnp.exp(m_old - m_new)                             # (tb, 1)
    s_old = s_ref[...]
    ez_old = ez_ref[...]
    # Rescale the running sums when the max moves; guard the k == 0 step so
    # 0 * (huge negative) cannot produce NaN.
    corr = jnp.where(s_old > 0.0, s_old * (m_old - m_new), 0.0)
    s_ref[...] = alpha * s_old + s_blk
    ez_ref[...] = alpha * (ez_old + corr) + ez_blk
    m_ref[...] = m_new

    @pl.when(k == nk - 1)
    def _():
        s = s_ref[...]
        # sum_j p_j * log p_j = sum(e*z)/s - log(s)   (z relative to row max)
        per_row = ez_ref[...] / s - jnp.log(s)                 # (tb, 1)
        if needs_row_mask:
            # Tail batch rows read garbage; use a select (not a multiply) so
            # NaN from garbage rows is dropped.  (tb,1)-sized => ~free.
            row_ids = i * tb + jax.lax.broadcasted_iota(jnp.int32, (tb, 1), 0)
            per_row = jnp.where(row_ids < total_batch, per_row, 0.0)
        out_ref[...] = jnp.sum(per_row, axis=0, keepdims=True)  # (1, 1) partial sum


def conditional_entropy_loss(x, *, tb=None, tc=None):
    """x: (B, C) logits (any float dtype).  Returns scalar float32 loss.

    Optional overrides: tb (multiple of 8), tc (== C or a multiple of 128).
    """
    B, C = x.shape
    itemsize = jnp.dtype(x.dtype).itemsize
    auto_tb, auto_tc, limit_cap = _plan_tiles(B, C)
    tb = auto_tb if tb is None else tb
    tc = auto_tc if tc is None else tc
    nb = pl.cdiv(B, tb)
    nc = pl.cdiv(C, tc)

    # vmem_limit derived from the actual footprint (double-buffered native
    # input + f32 intermediates + scratch), capped per generation.
    in_block = tb * tc * itemsize
    f32_block = tb * tc * 4
    footprint = 2 * in_block + 4 * f32_block + 8 * tb * 4 + 2 * _MiB
    vmem_limit = int(min(limit_cap, max(footprint, 16 * _MiB)))

    kernel = functools.partial(
        _cond_entropy_kernel, tb=tb, tc=tc, total_batch=B, total_c=C,
        needs_row_mask=(B % tb) != 0, needs_col_mask=(C % tc) != 0)

    cost = pl.CostEstimate(
        flops=5 * B * C,
        transcendentals=B * C + 4 * B,
        bytes_accessed=B * C * itemsize + nb * 4,
    )

    # NOTE: for very small blocks one could add pipeline_mode=pl.Buffered(3)
    # on the input spec; blocks here are budget-sized so 2 buffers overlap.
    partial_sums = pl.pallas_call(
        kernel,
        out_shape=jax.ShapeDtypeStruct((nb, 1), jnp.float32),
        grid_spec=pltpu.PrefetchScalarGridSpec(
            num_scalar_prefetch=0,
            grid=(nb, nc),
            in_specs=[pl.BlockSpec((tb, tc), lambda i, k: (i, k))],
            out_specs=pl.BlockSpec((1, 1), lambda i, k: (i, 0)),
            scratch_shapes=[pltpu.VMEM((tb, 1), jnp.float32)] * 3,
        ),
        compiler_params=pltpu.CompilerParams(
            dimension_semantics=("parallel", "arbitrary"),
            vmem_limit_bytes=vmem_limit,
        ),
        cost_estimate=cost,
    )(x)

    # Masked tail rows contributed 0, so summing nb partials == summing B rows.
    return -jnp.sum(partial_sums) / jnp.float32(B)


def _reference(x):
    x = x.astype(jnp.float32)
    logp = jax.nn.log_softmax(x, axis=1)
    p = jax.nn.softmax(x, axis=1)
    return -1.0 * jnp.mean(jnp.sum(p * logp, axis=1), axis=0)


if __name__ == "__main__":
    key = jax.random.PRNGKey(0)
    k1, k2, k3, k4 = jax.random.split(key, 4)

    # Case 1: small divisible batch, single tile.
    x1 = jax.random.normal(k1, (16, 32), dtype=jnp.float32)
    loss1 = jax.block_until_ready(conditional_entropy_loss(x1))
    ref1 = _reference(x1)
    assert jnp.allclose(loss1, ref1, atol=1e-5, rtol=1e-5), (loss1, ref1)

    # Case 2: batch not a multiple of the tile (tail-row masking).
    x2 = jax.random.normal(k2, (13, 32), dtype=jnp.float32) * 3.0
    loss2 = jax.block_until_ready(conditional_entropy_loss(x2))
    ref2 = _reference(x2)
    assert jnp.allclose(loss2, ref2, atol=1e-5, rtol=1e-5), (loss2, ref2)

    # Case 3: forced class tiling (online softmax) + row and column tails.
    x3 = jax.random.normal(k3, (13, 320), dtype=jnp.float32) * 2.0
    loss3 = jax.block_until_ready(conditional_entropy_loss(x3, tb=8, tc=128))
    ref3 = _reference(x3)
    assert jnp.allclose(loss3, ref3, atol=1e-5, rtol=1e-5), (loss3, ref3)

    # Case 4: bf16 input through the class-tiled path (native-dtype row max).
    x4 = jax.random.normal(k4, (16, 384), dtype=jnp.bfloat16)
    loss4 = jax.block_until_ready(conditional_entropy_loss(x4, tb=8, tc=128))
    ref4 = _reference(x4)
    assert jnp.allclose(loss4, ref4, atol=1e-3, rtol=1e-3), (loss4, ref4)

    print("KERNEL_OK")
</pallas_src>

<mosaic_0001>
module attributes {stable_mosaic.version = 11 : i64} {
  func.func @_cond_entropy_kernel(%arg0: i32, %arg1: i32, %arg2: memref<16x32xf32, #tpu.memory_space<vmem>>, %arg3: memref<1x1xf32, #tpu.memory_space<vmem>>, %arg4: memref<16x1xf32, #tpu.memory_space<vmem>>, %arg5: memref<16x1xf32, #tpu.memory_space<vmem>>, %arg6: memref<16x1xf32, #tpu.memory_space<vmem>>) attributes {dimension_semantics = [#tpu.dimension_semantics<parallel>, #tpu.dimension_semantics<arbitrary>], iteration_bounds = array<i64: 1, 1>, scalar_prefetch = 0 : i64, scratch_operands = 3 : i64, tpu.core_type = #tpu.core_type<tc>, window_params = [{transform_indices = @transform_0, window_bounds = array<i64: 16, 32>}, {transform_indices = @transform_1, window_bounds = array<i64: 1, 1>}]} {
    %c0_i32 = arith.constant 0 : i32
    %0 = arith.cmpi eq, %arg1, %c0_i32 : i32
    %1 = arith.extui %0 : i1 to i32
    %c0_i32_0 = arith.constant 0 : i32
    %2 = arith.cmpi ne, %1, %c0_i32_0 : i32
    scf.if %2 {
      %cst_20 = arith.constant -1.700000e+38 : f32
      %37 = vector.broadcast %cst_20 : f32 to vector<16x1xf32>
      %c0_21 = arith.constant 0 : index
      %c0_22 = arith.constant 0 : index
      %38 = vector.load %arg4[%c0_21, %c0_22] : memref<16x1xf32, #tpu.memory_space<vmem>>, vector<16x1xf32>
      tpu.vector_store %arg4[%c0_21, %c0_22], %37 {strides = array<i32>} : memref<16x1xf32, #tpu.memory_space<vmem>>, vector<16x1xf32>,
      %cst_23 = arith.constant 0.000000e+00 : f32
      %39 = vector.broadcast %cst_23 : f32 to vector<16x1xf32>
      %c0_24 = arith.constant 0 : index
      %c0_25 = arith.constant 0 : index
      %40 = vector.load %arg5[%c0_24, %c0_25] : memref<16x1xf32, #tpu.memory_space<vmem>>, vector<16x1xf32>
      tpu.vector_store %arg5[%c0_24, %c0_25], %39 {strides = array<i32>} : memref<16x1xf32, #tpu.memory_space<vmem>>, vector<16x1xf32>,
      %cst_26 = arith.constant 0.000000e+00 : f32
      %41 = vector.broadcast %cst_26 : f32 to vector<16x1xf32>
      %c0_27 = arith.constant 0 : index
      %c0_28 = arith.constant 0 : index
      %42 = vector.load %arg6[%c0_27, %c0_28] : memref<16x1xf32, #tpu.memory_space<vmem>>, vector<16x1xf32>
      tpu.vector_store %arg6[%c0_27, %c0_28], %41 {strides = array<i32>} : memref<16x1xf32, #tpu.memory_space<vmem>>, vector<16x1xf32>,
    } else {
    }
    %c0 = arith.constant 0 : index
    %c0_1 = arith.constant 0 : index
    %3 = vector.load %arg2[%c0, %c0_1] : memref<16x32xf32, #tpu.memory_space<vmem>>, vector<16x32xf32>
    %c0_2 = arith.constant 0 : index
    %c0_3 = arith.constant 0 : index
    %4 = vector.load %arg4[%c0_2, %c0_3] : memref<16x1xf32, #tpu.memory_space<vmem>>, vector<16x1xf32>
    %cst = arith.constant dense<0xFF800000> : vector<16xf32>
    %5 = vector.multi_reduction <maximumf>, %3, %cst [1] : vector<16x32xf32> to vector<16xf32>
    %6 = vector.shape_cast %5 : vector<16xf32> to vector<16x1xf32>
    %7 = arith.maximumf %4, %6 : vector<16x1xf32>
    %8 = vector.broadcast %7 : vector<16x1xf32> to vector<16x32xf32>
    %9 = arith.subf %3, %8 : vector<16x32xf32>
    %10 = math.exp %9 : vector<16x32xf32>
    %cst_4 = arith.constant dense<0.000000e+00> : vector<16xf32>
    %11 = vector.multi_reduction <add>, %10, %cst_4 [1] : vector<16x32xf32> to vector<16xf32>
    %12 = vector.shape_cast %11 : vector<16xf32> to vector<16x1xf32>
    %13 = arith.mulf %10, %9 : vector<16x32xf32>
    %cst_5 = arith.constant dense<0.000000e+00> : vector<16xf32>
    %14 = vector.multi_reduction <add>, %13, %cst_5 [1] : vector<16x32xf32> to vector<16xf32>
    %15 = vector.shape_cast %14 : vector<16xf32> to vector<16x1xf32>
    %16 = arith.subf %4, %7 : vector<16x1xf32>
    %17 = math.exp %16 : vector<16x1xf32>
    %c0_6 = arith.constant 0 : index
    %c0_7 = arith.constant 0 : index
    %18 = vector.load %arg5[%c0_6, %c0_7] : memref<16x1xf32, #tpu.memory_space<vmem>>, vector<16x1xf32>
    %c0_8 = arith.constant 0 : index
    %c0_9 = arith.constant 0 : index
    %19 = vector.load %arg6[%c0_8, %c0_9] : memref<16x1xf32, #tpu.memory_space<vmem>>, vector<16x1xf32>
    %cst_10 = arith.constant 0.000000e+00 : f32
    %20 = vector.broadcast %cst_10 : f32 to vector<16x1xf32>
    %21 = arith.cmpf ogt, %18, %20 : vector<16x1xf32>
    %22 = arith.subf %4, %7 : vector<16x1xf32>
    %23 = arith.mulf %18, %22 : vector<16x1xf32>
    %cst_11 = arith.constant 0.000000e+00 : f32
    %24 = vector.broadcast %cst_11 : f32 to vector<16x1xf32>
    %25 = arith.select %21, %23, %24 : vector<16x1xi1>, vector<16x1xf32>
    %26 = arith.mulf %17, %18 : vector<16x1xf32>
    %27 = arith.addf %26, %12 : vector<16x1xf32>
    %c0_12 = arith.constant 0 : index
    %c0_13 = arith.constant 0 : index
    %28 = vector.load %arg5[%c0_12, %c0_13] : memref<16x1xf32, #tpu.memory_space<vmem>>, vector<16x1xf32>
    tpu.vector_store %arg5[%c0_12, %c0_13], %27 {strides = array<i32>} : memref<16x1xf32, #tpu.memory_space<vmem>>, vector<16x1xf32>,
    %29 = arith.addf %19, %25 : vector<16x1xf32>
    %30 = arith.mulf %17, %29 : vector<16x1xf32>
    %31 = arith.addf %30, %15 : vector<16x1xf32>
    %c0_14 = arith.constant 0 : index
    %c0_15 = arith.constant 0 : index
    %32 = vector.load %arg6[%c0_14, %c0_15] : memref<16x1xf32, #tpu.memory_space<vmem>>, vector<16x1xf32>
    tpu.vector_store %arg6[%c0_14, %c0_15], %31 {strides = array<i32>} : memref<16x1xf32, #tpu.memory_space<vmem>>, vector<16x1xf32>,
    %c0_16 = arith.constant 0 : index
    %c0_17 = arith.constant 0 : index
    %33 = vector.load %arg4[%c0_16, %c0_17] : memref<16x1xf32, #tpu.memory_space<vmem>>, vector<16x1xf32>
    tpu.vector_store %arg4[%c0_16, %c0_17], %7 {strides = array<i32>} : memref<16x1xf32, #tpu.memory_space<vmem>>, vector<16x1xf32>,
    %c0_i32_18 = arith.constant 0 : i32
    %34 = arith.cmpi eq, %arg1, %c0_i32_18 : i32
    %35 = arith.extui %34 : i1 to i32
    %c0_i32_19 = arith.constant 0 : i32
    %36 = arith.cmpi ne, %35, %c0_i32_19 : i32
    scf.if %36 {
      %c0_20 = arith.constant 0 : index
      %c0_21 = arith.constant 0 : index
      %37 = vector.load %arg5[%c0_20, %c0_21] : memref<16x1xf32, #tpu.memory_space<vmem>>, vector<16x1xf32>
      %c0_22 = arith.constant 0 : index
      %c0_23 = arith.constant 0 : index
      %38 = vector.load %arg6[%c0_22, %c0_23] : memref<16x1xf32, #tpu.memory_space<vmem>>, vector<16x1xf32>
      %39 = arith.divf %38, %37 : vector<16x1xf32>
      %40 = math.log %37 : vector<16x1xf32>
      %41 = arith.subf %39, %40 : vector<16x1xf32>
      %cst_24 = arith.constant dense<0.000000e+00> : vector<1xf32>
      %42 = vector.multi_reduction <add>, %41, %cst_24 [0] : vector<16x1xf32> to vector<1xf32>
      %43 = vector.shape_cast %42 : vector<1xf32> to vector<1x1xf32>
      %c0_25 = arith.constant 0 : index
      %c0_26 = arith.constant 0 : index
      %44 = vector.load %arg3[%c0_25, %c0_26] : memref<1x1xf32, #tpu.memory_space<vmem>>, vector<1x1xf32>
      tpu.vector_store %arg3[%c0_25, %c0_26], %43 {strides = array<i32>} : memref<1x1xf32, #tpu.memory_space<vmem>>, vector<1x1xf32>,
    } else {
    }
    return
  }
  func.func @transform_0(%arg0: i32, %arg1: i32) -> (i32, i32) {
    %c0_i32 = arith.constant 0 : i32
    return %arg0, %arg1 : i32, i32
  }
  func.func @transform_1(%arg0: i32, %arg1: i32) -> (i32, i32) {
    %c0_i32 = arith.constant 0 : i32
    %c0_i32_0 = arith.constant 0 : i32
    return %arg0, %c0_i32 : i32, i32
  }
}

</mosaic_0001>

<llo_original>
// kernel: tpu_custom_call.1
$region0: #{tpu_custom_call.1}
  #allocation0 [shape = 'u32[]', space=smem, size = 0x4, offset = 0x4, fixed_abs, tag = 'smem constant byte address 0x4 - core index']
  #allocation1 [shape = 'u32[144,128]{1,0:T(1,128)}', space=vmem, size = 0x12000, scoped, tag = 'internal scratch']
  #allocation2 [shape = 'f32[16,1]{1,0:T(8,128)}', space=vmem, size = 0x2000, scoped, tag = 'scratch operand']
  #allocation3 [shape = 'f32[16,1]{1,0:T(8,128)}', space=vmem, size = 0x2000, scoped, tag = 'scratch operand']
  #allocation4 [shape = 'f32[16,1]{1,0:T(8,128)}', space=vmem, size = 0x2000, scoped, tag = 'scratch operand']
  %s0 = inlined_call_operand.hbm [shape: f32[16,32], index: 0, kind: input, shape index: {}]
  %s1 = inlined_call_operand.hbm [shape: f32[1,1], index: 1, kind: output, shape index: {}]
  %s2 = sld [smem:[#allocation0]]
  $region26: #{tpu_custom_call.1} parent=0
    _
  %s4 = ssub.s32 1, %s2
  %s5 = scalar_select 0, %s4, %s2
  $region1: #{tpu_custom_call.1} parent=0
    #allocation5 [shape = 'u8[8192]{0}', space=vmem, size = 0x2000, scoped, tag = 'input window, operand 0, single buffered']
    #allocation6 [shape = 's32[1]{0}', space=sflag, size = 0x4, scoped, tag = 'scoped memory for tpu_custom_call.1']
    #allocation7 [shape = 's32[1]{0}', space=sflag, size = 0x4, scoped, tag = 'scoped memory for tpu_custom_call.1']
    #allocation8 [shape = 'u8[512]{0}', space=vmem, size = 0x400, scoped, tag = 'output window, operand 0, single buffered']
    %6 = vsyncpa [#allocation6], 0
    %7 = vsyncpa [#allocation7], 0
    // Predicated region
    $region2: #{tpu_custom_call.1} parent=1 // pred_check
      _
    $region3: #{tpu_custom_call.1} parent=1 // pred_check_branch
      %9 = sbr.rel (0) target = $region5
    $region4: #{tpu_custom_call.1} parent=1 // pred_region
      %s11 = ssub.s32 256, 256
      %12 = vsyncadd [#allocation6], %s11
      %s13 = sshll.u32 [#allocation5], 4
      %s14 = int_to_ptr.vmem [resolvable:$true] %s13
      %19 = dma.hbm_to_vmem [thread:$0]  %s0, 256, %s14, [#allocation6], 128, 128, 8
    $region5: #{tpu_custom_call.1} parent=1 // pred_fallthru
      _
    // Predicated region
    $region6: #{tpu_custom_call.1} parent=1 // pred_check
      _
    $region7: #{tpu_custom_call.1} parent=1 // pred_check_branch
      %21 = sbr.rel (0) target = $region9
    $region8: #{tpu_custom_call.1} parent=1 // pred_region
      %22 = dma.done [#allocation6], 256
    $region9: #{tpu_custom_call.1} parent=1 // pred_fallthru
      _
    %p23 = scmp.eq.s32.totalorder 0, 0
    // Predicated region
    $region10: #{tpu_custom_call.1} parent=1 // pred_check
      %p24 = pneg %p23
    $region11: #{tpu_custom_call.1} parent=1 // pred_check_branch
      %26 = sbr.rel (%p24) target = $region13
    $region12: #{tpu_custom_call.1} parent=1 // pred_region
      %vm27 = vcmask 7168
      %28 = vst.msk [vmem:[#allocation2] sm:$0xff] %vm27, -1.7e+38
      %29 = vst.msk [vmem:[#allocation2 + $0x8] sm:$0xff] %vm27, -1.7e+38
      %30 = vst.msk [vmem:[#allocation3] sm:$0xff] %vm27, 0.0
      %31 = vst.msk [vmem:[#allocation3 + $0x8] sm:$0xff] %vm27, 0.0
      %32 = vst.msk [vmem:[#allocation4] sm:$0xff] %vm27, 0.0
      %33 = vst.msk [vmem:[#allocation4 + $0x8] sm:$0xff] %vm27, 0.0
    $region13: #{tpu_custom_call.1} parent=1 // pred_fallthru
      _
    %v34 = vld [vmem:[#allocation5] sm:$0xff]
    %v35 = vld [vmem:[#allocation5 + $0x8] sm:$0xff]
    %v36 = vld [vmem:[#allocation2] sm:$0xff]
    %v37 = vld [vmem:[#allocation2 + $0x8] sm:$0xff]
    %vm38 = vcmask 261120
    %v39 = vsel %vm38, %v34, -inf
    %40 = vmax.xlane.f32.xlu0 %v39
    %v41 = vpop.xlane.xlu0 %40
    %v42 = vsel %vm38, %v35, -inf
    %43 = vmax.xlane.f32.xlu0 %v42
    %v44 = vpop.xlane.xlu0 %43
    %v45 = vmax.f32 %v36, %v41
    %v46 = vmax.f32 %v37, %v44
    %48 = vset.pattern.permute.xlu0 0
    %49 = vperm.xlu0 %48, %v45
    %v50 = vpop.permute.xlu0 %49
    %53 = vset.pattern.permute.xlu0 0
    %54 = vperm.xlu0 %53, %v46
    %v55 = vpop.permute.xlu0 %54
    %v57 = vsub.f32 %v34, %v50
    %v58 = vsub.f32 %v35, %v55
    %v59 = vmul.f32 %v57, 1.442695
    %v60 = vpow.pop %v59
    %v61 = vmul.f32 %v58, 1.442695
    %v62 = vpow.pop %v61
    %v63 = vsel %vm38, %v60, 0.0
    %64 = vadd.xlane.f32.xlu0 %v63
    %v65 = vpop.xlane.xlu0 %64
    %v66 = vsel %vm38, %v62, 0.0
    %67 = vadd.xlane.f32.xlu0 %v66
    %v68 = vpop.xlane.xlu0 %67
    %v69 = vmul.f32 %v60, %v57
    %v70 = vmul.f32 %v62, %v58
    %v71 = vsel %vm38, %v69, 0.0
    %72 = vadd.xlane.f32.xlu0 %v71
    %v73 = vpop.xlane.xlu0 %72
    %v74 = vsel %vm38, %v70, 0.0
    %75 = vadd.xlane.f32.xlu0 %v74
    %v76 = vpop.xlane.xlu0 %75
    %v77 = vsub.f32 %v36, %v45
    %v78 = vsub.f32 %v37, %v46
    %v79 = vmul.f32 %v77, 1.442695
    %v80 = vpow.pop %v79
    %v81 = vmul.f32 %v78, 1.442695
    %v82 = vpow.pop %v81
    %v83 = vld [vmem:[#allocation3] sm:$0xff]
    %v84 = vld [vmem:[#allocation3 + $0x8] sm:$0xff]
    %v85 = vld [vmem:[#allocation4] sm:$0xff]
    %v86 = vld [vmem:[#allocation4 + $0x8] sm:$0xff]
    %vm87 = vcmp.gt.f32.partialorder %v83, 0.0
    %vm88 = vcmp.gt.f32.partialorder %v84, 0.0
    %v89 = vmul.f32 %v83, %v77
    %v90 = vmul.f32 %v84, %v78
    %v91 = vsel %vm87, %v89, 0.0
    %v92 = vsel %vm88, %v90, 0.0
    %v93 = vmul.f32 %v80, %v83
    %v94 = vmul.f32 %v82, %v84
    %v95 = vadd.f32 %v93, %v65
    %v96 = vadd.f32 %v94, %v68
    %vm97 = vcmask 7168
    %98 = vst.msk [vmem:[#allocation3] sm:$0xff] %vm97, %v95
    %99 = vst.msk [vmem:[#allocation3 + $0x8] sm:$0xff] %vm97, %v96
    %v100 = vadd.f32 %v85, %v91
    %v101 = vadd.f32 %v86, %v92
    %v102 = vmul.f32 %v80, %v100
    %v103 = vmul.f32 %v82, %v101
    %v104 = vadd.f32 %v102, %v73
    %v105 = vadd.f32 %v103, %v76
    %106 = vst.msk [vmem:[#allocation4] sm:$0xff] %vm97, %v104
    %107 = vst.msk [vmem:[#allocation4 + $0x8] sm:$0xff] %vm97, %v105
    %108 = vst.msk [vmem:[#allocation2] sm:$0xff] %vm97, %v45
    %109 = vst.msk [vmem:[#allocation2 + $0x8] sm:$0xff] %vm97, %v46
    // Predicated region
    $region14: #{tpu_custom_call.1} parent=1 // pred_check
      %p110 = pneg %p23
    $region15: #{tpu_custom_call.1} parent=1 // pred_check_branch
      %112 = sbr.rel (%p110) target = $region17
    $region16: #{tpu_custom_call.1} parent=1 // pred_region
      %v113 = vld [vmem:[#allocation3] sm:$0xff]
      %v114 = vld [vmem:[#allocation3 + $0x8] sm:$0xff]
      %v115 = vld [vmem:[#allocation4] sm:$0xff]
      %v116 = vld [vmem:[#allocation4 + $0x8] sm:$0xff]
      %v117 = vrcp.pop %v113
      %v118 = vmul.f32 %v115, %v117
      %v119 = vrcp.pop %v114
      %v120 = vmul.f32 %v116, %v119
      %v121 = vlog2.pop %v113
      %v122 = vmul.f32 %v121, 0.6931472
      %v123 = vlog2.pop %v114
      %v124 = vmul.f32 %v123, 0.6931472
      %v125 = vsub.f32 %v118, %v122
      %v126 = vsub.f32 %v120, %v124
      %v127 = vsel %vm97, %v125, 0.0
      %v128 = vsel %vm97, %v126, 0.0
      %v129 = vadd.f32 %v127, %v128
      %v130 = vrot.slane %v129, 4
      %v131 = vadd.f32 %v129, %v130
      %v132 = vrot.slane %v131, 2
      %v133 = vadd.f32 %v131, %v132
      %v134 = vrot.slane %v133, 1
      %v135 = vadd.f32 %v133, %v134
      %vm136 = vcmask 0
      %137 = vst.msk [vmem:[#allocation8] sm:$0x1] %vm136, %v135
    $region17: #{tpu_custom_call.1} parent=1 // pred_fallthru
      _
    // Predicated region
    $region18: #{tpu_custom_call.1} parent=1 // pred_check
      _
    $region19: #{tpu_custom_call.1} parent=1 // pred_check_branch
      %139 = sbr.rel (0) target = $region21
    $region20: #{tpu_custom_call.1} parent=1 // pred_region
      %s141 = ssub.s32 16, 16
      %142 = vsyncadd [#allocation7], %s141
      %s144 = sshll.u32 [#allocation8], 4
      %s145 = int_to_ptr.vmem [resolvable:$true] %s144
      %147 = dma.vmem_to_hbm [thread:$0]  %s145, 16, %s1, [#allocation7]
    $region21: #{tpu_custom_call.1} parent=1 // pred_fallthru
      _
    // Predicated region
    $region22: #{tpu_custom_call.1} parent=1 // pred_check
      _
    $region23: #{tpu_custom_call.1} parent=1 // pred_check_branch
      %149 = sbr.rel (0) target = $region25
    $region24: #{tpu_custom_call.1} parent=1 // pred_region
      %150 = dma.done [#allocation7], 16
    $region25: #{tpu_custom_call.1} parent=1 // pred_fallthru
      _
    %151 = vsyncpa [#allocation6], 1
    %152 = vsyncpa [#allocation7], 1

</llo_original>
